<compile_context>
chip_gen: v7x
topology: tpu7x:2x2x1
jax: 0.10.0
libtpu: 0.0.40
codegen_flags: <defaults>
</compile_context>

<pallas_src>
import functools

import jax
import jax.numpy as jnp
from jax.experimental import pallas as pl
from jax.experimental.pallas import tpu as pltpu

SUBLANE = 8    # f32 sublane tile
LANE = 128     # lane tile


def _round_up(n, m):
    return ((n + m - 1) // m) * m


def _pad_lane(a):
    """Zero-pad the last (lane) dim of `a` up to a multiple of 128."""
    n = a.shape[-1]
    n_pad = _round_up(n, LANE)
    if n_pad == n:
        return a
    pads = [(0, 0)] * (a.ndim - 1) + [(0, n_pad - n)]
    return jnp.pad(a, pads)


# ----------------------------------------------------------------------------- kernels


def _forward(x_ref, w1_ref, b1_ref, w2_ref, b2_ref):
    """Shared forward body. Returns q of shape [B_block, n_pad] (f32)."""
    x = x_ref[...]                      # [Bb, in_f]   f32
    w1 = w1_ref[...]                    # [in_f, hidden]
    in_f = x.shape[1]

    # Layer 1: tiny contraction (in_f == 4) as broadcast multiply-adds on the
    # VPU. Statically unrolled; keeps the MXU pipeline out of the hot path.
    h = b1_ref[...]                     # [1, hidden] -> broadcasts over batch
    for k in range(in_f):
        h = h + x[:, k:k + 1] * w1[k:k + 1, :]
    h = jnp.tanh(h)                     # EUP transcendental

    # Layer 2 on the MXU. w2/b2 arrive lane-padded to 128, so q (and the store
    # of q in the caller) is lane-dense.
    q = jnp.dot(h, w2_ref[...], preferred_element_type=jnp.float32) + b2_ref[...]
    return q


def _mlp_kernel(x_ref, w1_ref, b1_ref, w2_ref, b2_ref, o_ref):
    o_ref[...] = _forward(x_ref, w1_ref, b1_ref, w2_ref, b2_ref).astype(o_ref.dtype)


def _act_kernel(x_ref, w1_ref, b1_ref, w2_ref, b2_ref, a_ref, *, n_actions):
    """Forward + greedy argmax fused; writes the (broadcast) action index."""
    q = _forward(x_ref, w1_ref, b1_ref, w2_ref, b2_ref)           # [8, n_pad] f32
    lane = jax.lax.broadcasted_iota(jnp.int32, q.shape, 1)
    valid = lane < n_actions
    q_m = jnp.where(valid, q, -jnp.inf)
    q_max = jnp.max(q_m, axis=-1, keepdims=True)                  # [8, 1]
    is_max = jnp.logical_and(q_m == q_max, valid)
    # First (lowest) lane attaining the max -> matches torch.argmax tie-break.
    idx = jnp.where(is_max, lane.astype(jnp.float32), float(q.shape[-1]))
    action = jnp.min(idx, axis=-1, keepdims=True)                 # [8, 1] f32
    a_ref[...] = jnp.broadcast_to(action, a_ref.shape).astype(jnp.int32)


# ----------------------------------------------------------------------------- wrappers


@functools.partial(jax.jit, static_argnames=("block_b",))
def mlp_forward(x, w1, b1, w2, b2, *, block_b=512):
    """x: [B, in_features] -> q-values [B, n_actions], f32.

    Small B (<= block_b): single no-grid invocation, whole arrays in VMEM.
    Large B: batch-tiled grid with "parallel" semantics (engages both v7x TCs).
    """
    x = x.astype(jnp.float32)
    B, in_f = x.shape
    hidden = w1.shape[1]
    n_actions = w2.shape[1]
    n_pad = _round_up(n_actions, LANE)

    # Lane-pad the output-side weights/bias so the kernel's store is lane-dense.
    w2p = _pad_lane(w2)
    b2p = _pad_lane(b2)

    # Sublane-align the batch axis.
    block_b = max(SUBLANE, _round_up(block_b, SUBLANE))
    if B <= block_b:
        b_pad = _round_up(B, SUBLANE)
    else:
        b_pad = _round_up(B, block_b)
    x_pad = x if b_pad == B else jnp.pad(x, ((0, b_pad - B), (0, 0)))

    out_shape = jax.ShapeDtypeStruct((b_pad, n_pad), jnp.float32)

    if b_pad <= block_b:
        # Tiny footprint (< 20 KB): no grid, no tiling — avoid per-step overhead.
        vmem = pl.BlockSpec(memory_space=pltpu.MemorySpace.VMEM)
        out = pl.pallas_call(
            _mlp_kernel,
            out_shape=out_shape,
            in_specs=[vmem] * 5,
            out_specs=vmem,
        )(x_pad, w1, b1, w2p, b2p)
    else:
        grid = (b_pad // block_b,)
        out = pl.pallas_call(
            _mlp_kernel,
            out_shape=out_shape,
            grid=grid,
            in_specs=[
                pl.BlockSpec((block_b, in_f), lambda i: (i, 0)),
                pl.BlockSpec((in_f, hidden), lambda i: (0, 0)),
                pl.BlockSpec((1, hidden), lambda i: (0, 0)),
                pl.BlockSpec((hidden, n_pad), lambda i: (0, 0)),
                pl.BlockSpec((1, n_pad), lambda i: (0, 0)),
            ],
            out_specs=pl.BlockSpec((block_b, n_pad), lambda i: (i, 0)),
            compiler_params=pltpu.CompilerParams(
                dimension_semantics=("parallel",)),
        )(x_pad, w1, b1, w2p, b2p)

    return out[:B, :n_actions]


@jax.jit
def act(obs, params):
    """Equivalent of Network.act, fully on-device.

    Returns a device int32 scalar (no host sync here); convert with int(...)
    only when the host actually needs the value.
    """
    w1, b1, w2, b2 = params
    in_f = w1.shape[0]
    n_actions = w2.shape[1]
    n_pad = _round_up(n_actions, LANE)
    w2p = _pad_lane(w2)
    b2p = _pad_lane(b2)

    # Single observation padded to a full sublane tile (row 0 is the real obs).
    x = jnp.zeros((SUBLANE, in_f), jnp.float32).at[0, :].set(
        obs.reshape(-1).astype(jnp.float32))

    vmem = pl.BlockSpec(memory_space=pltpu.MemorySpace.VMEM)
    a = pl.pallas_call(
        functools.partial(_act_kernel, n_actions=n_actions),
        out_shape=jax.ShapeDtypeStruct((SUBLANE, n_pad), jnp.int32),
        in_specs=[vmem] * 5,
        out_specs=vmem,
    )(x, w1, b1, w2p, b2p)
    return a[0, 0]


def init_params(key, in_features=4, hidden=64, n_actions=2):
    """nn.Linear-style init U(-1/sqrt(fan_in), 1/sqrt(fan_in)); W stored as [in, out]."""
    k1, k2, k3, k4 = jax.random.split(key, 4)
    bound1 = 1.0 / jnp.sqrt(in_features)
    bound2 = 1.0 / jnp.sqrt(hidden)
    w1 = jax.random.uniform(k1, (in_features, hidden), jnp.float32, -bound1, bound1)
    b1 = jax.random.uniform(k2, (1, hidden), jnp.float32, -bound1, bound1)
    w2 = jax.random.uniform(k3, (hidden, n_actions), jnp.float32, -bound2, bound2)
    b2 = jax.random.uniform(k4, (1, n_actions), jnp.float32, -bound2, bound2)
    return w1, b1, w2, b2


# TODO(synk): gym environment stepping, replay buffer, and the DQN training loop
# are host-side RL plumbing with no Pallas equivalent; only forward/act are kernels.

if __name__ == "__main__":
    key = jax.random.PRNGKey(0)
    k_params, k_x, k_x2 = jax.random.split(key, 3)

    IN_FEATURES, HIDDEN, N_ACTIONS, BATCH = 4, 64, 2, 2
    params = init_params(k_params, IN_FEATURES, HIDDEN, N_ACTIONS)
    w1, b1, w2, b2 = params

    # Small batch (B=2): single no-grid invocation.
    x = jax.random.normal(k_x, (BATCH, IN_FEATURES), jnp.float32)
    q_values = mlp_forward(x, *params)
    jax.block_until_ready(q_values)

    ref = jnp.tanh(x @ w1 + b1) @ w2 + b2
    assert q_values.shape == (BATCH, N_ACTIONS)
    assert jnp.allclose(q_values, ref, atol=1e-5, rtol=1e-5)

    # Larger batch through the batch-tiled grid path ("parallel" semantics).
    x_big = jax.random.normal(k_x2, (32, IN_FEATURES), jnp.float32)
    q_big = mlp_forward(x_big, *params, block_b=8)
    jax.block_until_ready(q_big)
    ref_big = jnp.tanh(x_big @ w1 + b1) @ w2 + b2
    assert jnp.allclose(q_big, ref_big, atol=1e-5, rtol=1e-5)

    # Fused greedy-action kernel (argmax on-device; host conversion only here).
    a_dev = act(x[0], params)
    jax.block_until_ready(a_dev)
    assert int(a_dev) == int(jnp.argmax(ref[0]))

    print("KERNEL_OK")
</pallas_src>

<mosaic_0001>
module attributes {stable_mosaic.version = 11 : i64} {
  func.func @_mlp_kernel(%arg0: memref<8x4xf32, #tpu.memory_space<vmem>>, %arg1: memref<4x64xf32, #tpu.memory_space<vmem>>, %arg2: memref<1x64xf32, #tpu.memory_space<vmem>>, %arg3: memref<64x128xf32, #tpu.memory_space<vmem>>, %arg4: memref<1x128xf32, #tpu.memory_space<vmem>>, %arg5: memref<8x128xf32, #tpu.memory_space<vmem>>) attributes {dimension_semantics = [], scalar_prefetch = 0 : i64, scratch_operands = 0 : i64, tpu.core_type = #tpu.core_type<tc>} {
    %c0 = arith.constant 0 : index
    %c0_0 = arith.constant 0 : index
    %0 = vector.load %arg0[%c0, %c0_0] : memref<8x4xf32, #tpu.memory_space<vmem>>, vector<8x4xf32>
    %c0_1 = arith.constant 0 : index
    %c0_2 = arith.constant 0 : index
    %1 = vector.load %arg1[%c0_1, %c0_2] : memref<4x64xf32, #tpu.memory_space<vmem>>, vector<4x64xf32>
    %c0_3 = arith.constant 0 : index
    %c0_4 = arith.constant 0 : index
    %2 = vector.load %arg2[%c0_3, %c0_4] : memref<1x64xf32, #tpu.memory_space<vmem>>, vector<1x64xf32>
    %3 = vector.extract_strided_slice %0 {offsets = [0, 0], sizes = [8, 1], strides = [1, 1]} : vector<8x4xf32> to vector<8x1xf32>
    %4 = vector.extract_strided_slice %1 {offsets = [0, 0], sizes = [1, 64], strides = [1, 1]} : vector<4x64xf32> to vector<1x64xf32>
    %5 = vector.broadcast %3 : vector<8x1xf32> to vector<8x64xf32>
    %6 = vector.broadcast %4 : vector<1x64xf32> to vector<8x64xf32>
    %7 = arith.mulf %5, %6 : vector<8x64xf32>
    %8 = vector.broadcast %2 : vector<1x64xf32> to vector<8x64xf32>
    %9 = arith.addf %8, %7 : vector<8x64xf32>
    %10 = vector.extract_strided_slice %0 {offsets = [0, 1], sizes = [8, 1], strides = [1, 1]} : vector<8x4xf32> to vector<8x1xf32>
    %11 = vector.extract_strided_slice %1 {offsets = [1, 0], sizes = [1, 64], strides = [1, 1]} : vector<4x64xf32> to vector<1x64xf32>
    %12 = vector.broadcast %10 : vector<8x1xf32> to vector<8x64xf32>
    %13 = vector.broadcast %11 : vector<1x64xf32> to vector<8x64xf32>
    %14 = arith.mulf %12, %13 : vector<8x64xf32>
    %15 = arith.addf %9, %14 : vector<8x64xf32>
    %16 = vector.extract_strided_slice %0 {offsets = [0, 2], sizes = [8, 1], strides = [1, 1]} : vector<8x4xf32> to vector<8x1xf32>
    %17 = vector.extract_strided_slice %1 {offsets = [2, 0], sizes = [1, 64], strides = [1, 1]} : vector<4x64xf32> to vector<1x64xf32>
    %18 = vector.broadcast %16 : vector<8x1xf32> to vector<8x64xf32>
    %19 = vector.broadcast %17 : vector<1x64xf32> to vector<8x64xf32>
    %20 = arith.mulf %18, %19 : vector<8x64xf32>
    %21 = arith.addf %15, %20 : vector<8x64xf32>
    %22 = vector.extract_strided_slice %0 {offsets = [0, 3], sizes = [8, 1], strides = [1, 1]} : vector<8x4xf32> to vector<8x1xf32>
    %23 = vector.extract_strided_slice %1 {offsets = [3, 0], sizes = [1, 64], strides = [1, 1]} : vector<4x64xf32> to vector<1x64xf32>
    %24 = vector.broadcast %22 : vector<8x1xf32> to vector<8x64xf32>
    %25 = vector.broadcast %23 : vector<1x64xf32> to vector<8x64xf32>
    %26 = arith.mulf %24, %25 : vector<8x64xf32>
    %27 = arith.addf %21, %26 : vector<8x64xf32>
    %28 = math.tanh %27 : vector<8x64xf32>
    %c0_5 = arith.constant 0 : index
    %c0_6 = arith.constant 0 : index
    %29 = vector.load %arg3[%c0_5, %c0_6] : memref<64x128xf32, #tpu.memory_space<vmem>>, vector<64x128xf32>
    %cst = arith.constant dense<0.000000e+00> : vector<8x128xf32>
    %30 = tpu.matmul %28, %29, %cst {dimension_numbers = #tpu.dot_dimension_numbers<[1], [0], [0], [1], [0, 0, 1, 1], [], []>} : vector<8x64xf32>, vector<64x128xf32>, vector<8x128xf32> -> vector<8x128xf32>
    %c0_7 = arith.constant 0 : index
    %c0_8 = arith.constant 0 : index
    %31 = vector.load %arg4[%c0_7, %c0_8] : memref<1x128xf32, #tpu.memory_space<vmem>>, vector<1x128xf32>
    %32 = vector.broadcast %31 : vector<1x128xf32> to vector<8x128xf32>
    %33 = arith.addf %30, %32 : vector<8x128xf32>
    %c0_9 = arith.constant 0 : index
    %c0_10 = arith.constant 0 : index
    %34 = vector.load %arg5[%c0_9, %c0_10] : memref<8x128xf32, #tpu.memory_space<vmem>>, vector<8x128xf32>
    tpu.vector_store %arg5[%c0_9, %c0_10], %33 {strides = array<i32>} : memref<8x128xf32, #tpu.memory_space<vmem>>, vector<8x128xf32>,
    return
  }
}

</mosaic_0001>

<llo_original>
// kernel: mlp_forward.1
$region0: #{mlp_forward.1}
  #allocation0 [shape = 'u32[]', space=smem, size = 0x4, offset = 0x4, fixed_abs, tag = 'smem constant byte address 0x4 - core index']
  #allocation1 [shape = 'u32[144,128]{1,0:T(1,128)}', space=vmem, size = 0x12000, scoped, tag = 'internal scratch']
  %s0 = inlined_call_operand.vmem [shape: f32[8,4], index: 0, kind: input, shape index: {}]
  %s1 = inlined_call_operand.vmem [shape: f32[4,64], index: 1, kind: input, shape index: {}]
  %s2 = inlined_call_operand.vmem [shape: f32[1,64], index: 2, kind: input, shape index: {}]
  %s3 = inlined_call_operand.vmem [shape: f32[64,128], index: 3, kind: input, shape index: {}]
  %s4 = inlined_call_operand.vmem [shape: f32[1,128], index: 4, kind: input, shape index: {}]
  %s5 = inlined_call_operand.vmem [shape: f32[8,128], index: 5, kind: output, shape index: {}]
  %s6 = sld [smem:[#allocation0]]
  $region30: #{mlp_forward.1} parent=0
    _
  %s8 = ssub.s32 1, %s6
  %s9 = scalar_select 0, %s8, %s6
  // Predicated region
  $region2: #{mlp_forward.1} parent=0 // pred_check
    _
  $region3: #{mlp_forward.1} parent=0 // pred_check_branch
    %11 = sbr.rel (0) target = $region5
  $region4: #{mlp_forward.1} parent=0 // pred_region
    _
  $region5: #{mlp_forward.1} parent=0 // pred_fallthru
    _
  // Predicated region
  $region6: #{mlp_forward.1} parent=0 // pred_check
    _
  $region7: #{mlp_forward.1} parent=0 // pred_check_branch
    %13 = sbr.rel (0) target = $region9
  $region8: #{mlp_forward.1} parent=0 // pred_region
    _
  $region9: #{mlp_forward.1} parent=0 // pred_fallthru
    _
  // Predicated region
  $region10: #{mlp_forward.1} parent=0 // pred_check
    _
  $region11: #{mlp_forward.1} parent=0 // pred_check_branch
    %15 = sbr.rel (0) target = $region13
  $region12: #{mlp_forward.1} parent=0 // pred_region
    _
  $region13: #{mlp_forward.1} parent=0 // pred_fallthru
    _
  // Predicated region
  $region14: #{mlp_forward.1} parent=0 // pred_check
    _
  $region15: #{mlp_forward.1} parent=0 // pred_check_branch
    %17 = sbr.rel (0) target = $region17
  $region16: #{mlp_forward.1} parent=0 // pred_region
    _
  $region17: #{mlp_forward.1} parent=0 // pred_fallthru
    _
  // Predicated region
  $region18: #{mlp_forward.1} parent=0 // pred_check
    _
  $region19: #{mlp_forward.1} parent=0 // pred_check_branch
    %19 = sbr.rel (0) target = $region21
  $region20: #{mlp_forward.1} parent=0 // pred_region
    _
  $region21: #{mlp_forward.1} parent=0 // pred_fallthru
    _
  %v20 = vld [vmem:[%s0] sm:$0xff]
  %v21 = vld [vmem:[%s1] sm:$0xf]
  %v22 = vld [vmem:[%s2] sm:$0x1]
  %24 = vset.pattern.permute.xlu0 0
  %25 = vperm.xlu0 %24, %v20
  %v26 = vpop.permute.xlu0 %25
  %v28 = vlaneseq
  %v29 = vshrl.u32 %v28, 7
  %v30 = vsub.s32 0, %v29
  %v31 = vrot.slane %v21, %v30
  %v32 = vmul.f32 %v26, %v31
  %v34 = vlaneseq
  %v35 = vshrl.u32 %v34, 7
  %v36 = vsub.s32 0, %v35
  %v37 = vrot.slane %v22, %v36
  %v39 = vadd.f32 %v37, %v32
  %40 = vset.pattern.permute.xlu0 1
  %41 = vperm.xlu0 %40, %v20
  %v42 = vpop.permute.xlu0 %41
  %v44 = vlaneseq
  %v45 = vshrl.u32 %v44, 7
  %v46 = vsub.s32 1, %v45
  %v47 = vrot.slane %v21, %v46
  %v48 = vmul.f32 %v42, %v47
  %v49 = vadd.f32 %v39, %v48
  %50 = vset.pattern.permute.xlu0 2
  %51 = vperm.xlu0 %50, %v20
  %v52 = vpop.permute.xlu0 %51
  %v54 = vlaneseq
  %v55 = vshrl.u32 %v54, 7
  %v56 = vsub.s32 2, %v55
  %v57 = vrot.slane %v21, %v56
  %v58 = vmul.f32 %v52, %v57
  %v59 = vadd.f32 %v49, %v58
  %60 = vset.pattern.permute.xlu0 3
  %61 = vperm.xlu0 %60, %v20
  %v62 = vpop.permute.xlu0 %61
  %v64 = vlaneseq
  %v65 = vshrl.u32 %v64, 7
  %v66 = vsub.s32 3, %v65
  %v67 = vrot.slane %v21, %v66
  %v68 = vmul.f32 %v62, %v67
  %v69 = vadd.f32 %v59, %v68
  %v70 = vtanh.pop %v69
  %v71 = vld [vmem:[%s3] sm:$0xff]
  %v72 = vld [vmem:[%s3 + $0x8] sm:$0xff]
  %v73 = vld [vmem:[%s3 + $0x10] sm:$0xff]
  %v74 = vld [vmem:[%s3 + $0x18] sm:$0xff]
  %v75 = vld [vmem:[%s3 + $0x20] sm:$0xff]
  %v76 = vld [vmem:[%s3 + $0x28] sm:$0xff]
  %v77 = vld [vmem:[%s3 + $0x30] sm:$0xff]
  %v78 = vld [vmem:[%s3 + $0x38] sm:$0xff]
  %v79 = vld [vmem:[%s4] sm:$0x1]
  %v81 = vlaneseq
  %v82 = vshrl.u32 %v81, 7
  %v83 = vsub.s32 0, %v82
  %v84 = vrot.slane %v79, %v83
  %vm86 = vcmask 523264
  %v88 = vsel %vm86, %v70, 0
  %90 = vmatprep.subr.mxu0 0.0
  %91 = vmatpush1.msra.mxu0 %v71
  %92 = vmatprep.subr.mxu0 0.0
  %93 = vmatpush1.msra.mxu0 %v72
  %94 = vmatprep.subr.mxu0 0.0
  %95 = vmatpush1.msra.mxu0 %v73
  %96 = vmatprep.subr.mxu0 0.0
  %97 = vmatpush1.msra.mxu0 %v74
  %98 = vmatprep.subr.mxu0 0.0
  %99 = vmatpush1.msra.mxu0 %v75
  %100 = vmatprep.subr.mxu0 0.0
  %101 = vmatpush1.msra.mxu0 %v76
  %102 = vmatprep.subr.mxu0 0.0
  %103 = vmatpush1.msra.mxu0 %v77
  %104 = vmatprep.subr.mxu0 0.0
  %105 = vmatpush1.msra.mxu0 %v78
  %106 = vmatprep.subr.mxu0 0.0
  %107 = vmatpush1.msra.mxu0 0.0
  %108 = vmatprep.subr.mxu0 0.0
  %109 = vmatpush1.msra.mxu0 0.0
  %110 = vmatprep.subr.mxu0 0.0
  %111 = vmatpush1.msra.mxu0 0.0
  %112 = vmatprep.subr.mxu0 0.0
  %113 = vmatpush1.msra.mxu0 0.0
  %114 = vmatprep.subr.mxu0 0.0
  %115 = vmatpush1.msra.mxu0 0.0
  %116 = vmatprep.subr.mxu0 0.0
  %117 = vmatpush1.msra.mxu0 0.0
  %118 = vmatprep.subr.mxu0 0.0
  %119 = vmatpush1.msra.mxu0 0.0
  %120 = vmatprep.subr.mxu0 0.0
  %121 = vmatpush1.msra.mxu0 0.0
  %122 = vmatprep.subr.mxu0 0.0
  %123 = vmatpush1.msra.mxu0 0.0
  %124 = vmatprep.subr.mxu0 0.0
  %125 = vmatpush1.msra.mxu0 0.0
  %126 = vmatprep.subr.mxu0 0.0
  %127 = vmatpush1.msra.mxu0 0.0
  %128 = vmatprep.subr.mxu0 0.0
  %129 = vmatpush1.msra.mxu0 0.0
  %130 = vmatprep.subr.mxu0 0.0
  %131 = vmatpush1.msra.mxu0 0.0
  %132 = vmatprep.subr.mxu0 0.0
  %133 = vmatpush1.msra.mxu0 0.0
  %134 = vmatprep.subr.mxu0 0.0
  %135 = vmatpush1.msra.mxu0 0.0
  %136 = vmatprep.subr.mxu0 0.0
  %137 = vmatpush1.msra.mxu0 0.0
  %138 = vmatprep.subr.mxu0 0.0
  %139 = vmatpush1.msra.mxu0 0.0
  %140 = vmatprep.subr.mxu0 0.0
  %141 = vmatpush1.msra.mxu0 0.0
  %142 = vmatprep.subr.mxu0 0.0
  %143 = vmatpush1.msra.mxu0 0.0
  %144 = vmatprep.subr.mxu0 0.0
  %145 = vmatpush1.msra.mxu0 0.0
  %146 = vmatprep.subr.mxu0 0.0
  %147 = vmatpush1.msra.mxu0 0.0
  %148 = vmatprep.subr.mxu0 0.0
  %149 = vmatpush1.msra.mxu0 0.0
  %150 = vmatprep.subr.mxu0 0.0
  %151 = vmatpush1.msra.mxu0 0.0
  %152 = vmatprep.subr.mxu0 0.0
  %153 = vmatpush1.msra.mxu0 0.0
  %154 = vmatprep.mubr.f32.mxu0 0.0
  %155 = vmatmul.mubr.f32.gmra.mrb[0].mxu0 %v88
  %v156 = vpop.f32.mrb[0].mxu0
  %v157 = vadd.f32 %v84, %v156
  %v158 = vpop.f32.mrb[0].mxu0
  %159 = vdwg.mxu0
  %160 = vst [vmem:[%s5] sm:$0xff] %v157
  // Predicated region
  $region22: #{mlp_forward.1} parent=0 // pred_check
    _
  $region23: #{mlp_forward.1} parent=0 // pred_check_branch
    %162 = sbr.rel (0) target = $region25
  $region24: #{mlp_forward.1} parent=0 // pred_region
    _
  $region25: #{mlp_forward.1} parent=0 // pred_fallthru
    _
  // Predicated region
  $region26: #{mlp_forward.1} parent=0 // pred_check
    _
  $region27: #{mlp_forward.1} parent=0 // pred_check_branch
    %164 = sbr.rel (0) target = $region29
  $region28: #{mlp_forward.1} parent=0 // pred_region
    _
  $region29: #{mlp_forward.1} parent=0 // pred_fallthru
    _

</llo_original>
